<compile_context>
chip_gen: v6e
topology: v6e:2x2x1
jax: 0.10.0
libtpu: 0.0.40
codegen_flags: <defaults>
</compile_context>

<pallas_src>
import jax
import jax.numpy as jnp
from jax.experimental import pallas as pl
from jax.experimental.pallas import tpu as pltpu


def _shortcut_kernel(x_ref, idn_ref, w_ref, shift_ref, o_ref):
    # x_ref / o_ref: (Cout, TILE_P)   idn_ref: (Cin, TILE_P)
    # w_ref: (Cout, Cin) with BN scale folded in;  shift_ref: (Cout, 1)
    z = jnp.dot(w_ref[...], idn_ref[...], preferred_element_type=jnp.float32)
    o_ref[...] = (x_ref[...].astype(jnp.float32) + z
                  + shift_ref[...]).astype(o_ref.dtype)


def _pick_tile_p(P, target=1024):
    """Largest multiple of 128 that divides P (capped at `target`), else full P."""
    if P % 128 == 0:
        best = 128
        t = 256
        while t <= min(P, target):
            if P % t == 0:
                best = t
            t += 128
        return best
    return P  # full extent is always a legal block shape


def shortcut_forward(x_nchw, identity_nchw, conv_w, conv_b,
                     bn_gamma, bn_beta, bn_mean, bn_var, *,
                     stride=2, eps=1e-5):
    """x_nchw: (N, Cout, Ho, Wo); identity_nchw: (N, Cin, H, W), Ho = H // stride."""
    N, Cout, Ho, Wo = x_nchw.shape
    _, Cin, H, W = identity_nchw.shape
    P = Ho * Wo

    # Strided spatial subsample for the 1x1 / stride-2 conv. Channel-major, so
    # only a strided slice + free reshape (no transposes of the big tensors).
    # TODO(synk): fuse this subsample into the kernel DMA (manual strided copy)
    # to save one HBM round trip of the Cin-sized tensor.
    idn_s = identity_nchw[:, :, ::stride, ::stride].reshape(N, Cin, P)
    x_flat = x_nchw.reshape(N, Cout, P)  # free reshape, stays channel-major

    # Fold conv bias + eval-mode BN into the weight and a per-channel shift.
    # TODO(synk): BatchNorm uses running stats (eval mode); PyTorch
    # training-mode batch statistics are not reproduced here.
    scale = bn_gamma / jnp.sqrt(bn_var + eps)                       # (Cout,)
    w_scaled = (conv_w.reshape(Cout, Cin) * scale[:, None]).astype(jnp.float32)
    shift = ((conv_b - bn_mean) * scale + bn_beta).reshape(Cout, 1)

    tile_p = _pick_tile_p(P)
    grid = (N, P // tile_p)

    out_flat = pl.pallas_call(
        _shortcut_kernel,
        out_shape=jax.ShapeDtypeStruct((N, Cout, P), x_nchw.dtype),
        grid=grid,
        in_specs=[
            pl.BlockSpec((None, Cout, tile_p), lambda n, p: (n, 0, p)),  # x
            pl.BlockSpec((None, Cin, tile_p), lambda n, p: (n, 0, p)),   # identity
            pl.BlockSpec((Cout, Cin), lambda n, p: (0, 0)),              # weight (resident)
            pl.BlockSpec((Cout, 1), lambda n, p: (0, 0)),                # shift (resident)
        ],
        out_specs=pl.BlockSpec((None, Cout, tile_p), lambda n, p: (n, 0, p)),
        compiler_params=pltpu.CompilerParams(
            dimension_semantics=("parallel", "parallel")),
    )(x_flat, idn_s, w_scaled, shift)

    return out_flat.reshape(N, Cout, Ho, Wo)


if __name__ == "__main__":
    key = jax.random.PRNGKey(0)
    k1, k2, k3, k4, k5, k6, k7 = jax.random.split(key, 7)

    N, Cin, H, W = 2, 4, 16, 16
    Cout, stride = 8, 2
    Ho, Wo = H // stride, W // stride

    # `identity` feeds the conv+BN branch; `x` is the main (drop_path=Identity) path.
    identity = jax.random.normal(k1, (N, Cin, H, W), jnp.float32)
    x = jax.random.normal(k2, (N, Cout, Ho, Wo), jnp.float32)

    # Deterministic synthetic parameters (shapes per nn.Conv2d / nn.BatchNorm2d).
    conv_w = jax.random.normal(k3, (Cout, Cin, 1, 1), jnp.float32) * 0.1
    conv_b = jax.random.normal(k4, (Cout,), jnp.float32) * 0.1
    bn_gamma = jnp.abs(jax.random.normal(k5, (Cout,), jnp.float32)) + 0.5
    bn_beta = jax.random.normal(k6, (Cout,), jnp.float32) * 0.1
    bn_mean = jax.random.normal(k7, (Cout,), jnp.float32) * 0.1
    bn_var = jnp.ones((Cout,), jnp.float32)

    out = shortcut_forward(x, identity, conv_w, conv_b,
                           bn_gamma, bn_beta, bn_mean, bn_var, stride=stride)
    jax.block_until_ready(out)

    # Sanity check against a pure-JAX reference of the PyTorch module.
    idn_s = identity[:, :, ::stride, ::stride]
    conv = jnp.einsum('ncxy,oc->noxy', idn_s, conv_w.reshape(Cout, Cin)) \
        + conv_b[None, :, None, None]
    bn = (conv - bn_mean[None, :, None, None]) \
        / jnp.sqrt(bn_var + 1e-5)[None, :, None, None] \
        * bn_gamma[None, :, None, None] + bn_beta[None, :, None, None]
    ref = x + bn

    assert out.shape == (N, Cout, Ho, Wo)
    assert jnp.allclose(out, ref, atol=1e-4, rtol=1e-5)

    print("KERNEL_OK")
</pallas_src>

<mosaic_0001>
module attributes {stable_mosaic.version = 11 : i64} {
  func.func @_shortcut_kernel(%arg0: i32, %arg1: i32, %arg2: memref<1x8x64xf32, #tpu.memory_space<vmem>>, %arg3: memref<1x4x64xf32, #tpu.memory_space<vmem>>, %arg4: memref<8x4xf32, #tpu.memory_space<vmem>>, %arg5: memref<8x1xf32, #tpu.memory_space<vmem>>, %arg6: memref<1x8x64xf32, #tpu.memory_space<vmem>>) attributes {dimension_semantics = [#tpu.dimension_semantics<parallel>, #tpu.dimension_semantics<parallel>], iteration_bounds = array<i64: 2, 1>, scalar_prefetch = 0 : i64, scratch_operands = 0 : i64, tpu.core_type = #tpu.core_type<tc>, window_params = [{transform_indices = @transform_0, window_bounds = array<i64: 1, 8, 64>}, {transform_indices = @transform_1, window_bounds = array<i64: 1, 4, 64>}, {pipeline_mode = #tpu.pipeline_mode<synchronous>, transform_indices = @transform_2, window_bounds = array<i64: 8, 4>}, {pipeline_mode = #tpu.pipeline_mode<synchronous>, transform_indices = @transform_3, window_bounds = array<i64: 8, 1>}, {transform_indices = @transform_4, window_bounds = array<i64: 1, 8, 64>}]} {
    %c0 = arith.constant 0 : index
    %c0_0 = arith.constant 0 : index
    %0 = vector.load %arg4[%c0, %c0_0] : memref<8x4xf32, #tpu.memory_space<vmem>>, vector<8x4xf32>
    %c0_1 = arith.constant 0 : index
    %c0_2 = arith.constant 0 : index
    %c0_3 = arith.constant 0 : index
    %1 = vector.load %arg3[%c0_1, %c0_2, %c0_3] : memref<1x4x64xf32, #tpu.memory_space<vmem>>, vector<1x4x64xf32>
    %2 = vector.shape_cast %1 : vector<1x4x64xf32> to vector<4x64xf32>
    %cst = arith.constant dense<0.000000e+00> : vector<8x64xf32>
    %3 = tpu.matmul %0, %2, %cst {dimension_numbers = #tpu.dot_dimension_numbers<[1], [0], [0], [1], [0, 0, 1, 1], [], []>} : vector<8x4xf32>, vector<4x64xf32>, vector<8x64xf32> -> vector<8x64xf32>
    %c0_4 = arith.constant 0 : index
    %c0_5 = arith.constant 0 : index
    %c0_6 = arith.constant 0 : index
    %4 = vector.load %arg2[%c0_4, %c0_5, %c0_6] : memref<1x8x64xf32, #tpu.memory_space<vmem>>, vector<1x8x64xf32>
    %5 = vector.shape_cast %4 : vector<1x8x64xf32> to vector<8x64xf32>
    %6 = arith.addf %5, %3 : vector<8x64xf32>
    %c0_7 = arith.constant 0 : index
    %c0_8 = arith.constant 0 : index
    %7 = vector.load %arg5[%c0_7, %c0_8] : memref<8x1xf32, #tpu.memory_space<vmem>>, vector<8x1xf32>
    %8 = vector.broadcast %7 : vector<8x1xf32> to vector<8x64xf32>
    %9 = arith.addf %6, %8 : vector<8x64xf32>
    %c0_9 = arith.constant 0 : index
    %c0_10 = arith.constant 0 : index
    %c0_11 = arith.constant 0 : index
    %10 = vector.load %arg6[%c0_9, %c0_10, %c0_11] : memref<1x8x64xf32, #tpu.memory_space<vmem>>, vector<1x8x64xf32>
    %11 = vector.shape_cast %10 : vector<1x8x64xf32> to vector<8x64xf32>
    %12 = vector.shape_cast %9 : vector<8x64xf32> to vector<1x8x64xf32>
    tpu.vector_store %arg6[%c0_9, %c0_10, %c0_11], %12 {strides = array<i32>} : memref<1x8x64xf32, #tpu.memory_space<vmem>>, vector<1x8x64xf32>,
    return
  }
  func.func @transform_0(%arg0: i32, %arg1: i32) -> (i32, i32, i32) {
    %c0_i32 = arith.constant 0 : i32
    %c0_i32_0 = arith.constant 0 : i32
    return %arg0, %c0_i32, %arg1 : i32, i32, i32
  }
  func.func @transform_1(%arg0: i32, %arg1: i32) -> (i32, i32, i32) {
    %c0_i32 = arith.constant 0 : i32
    %c0_i32_0 = arith.constant 0 : i32
    return %arg0, %c0_i32, %arg1 : i32, i32, i32
  }
  func.func @transform_2(%arg0: i32, %arg1: i32) -> (i32, i32) {
    %c0_i32 = arith.constant 0 : i32
    %c0_i32_0 = arith.constant 0 : i32
    %c0_i32_1 = arith.constant 0 : i32
    return %c0_i32, %c0_i32_0 : i32, i32
  }
  func.func @transform_3(%arg0: i32, %arg1: i32) -> (i32, i32) {
    %c0_i32 = arith.constant 0 : i32
    %c0_i32_0 = arith.constant 0 : i32
    %c0_i32_1 = arith.constant 0 : i32
    return %c0_i32, %c0_i32_0 : i32, i32
  }
  func.func @transform_4(%arg0: i32, %arg1: i32) -> (i32, i32, i32) {
    %c0_i32 = arith.constant 0 : i32
    %c0_i32_0 = arith.constant 0 : i32
    return %arg0, %c0_i32, %arg1 : i32, i32, i32
  }
}

</mosaic_0001>

<llo_original>
// kernel: tpu_custom_call.1
$region0: #{tpu_custom_call.1}
  #allocation0 [shape = 'u32[]', space=smem, size = 0x4, offset = 0x4, fixed_abs, tag = 'smem constant byte address 0x4 - core index']
  #allocation1 [shape = 'u32[144,128]{1,0:T(1,128)}', space=vmem, size = 0x12000, scoped, tag = 'internal scratch']
  %s0 = inlined_call_operand.vmem [shape: f32[2,8,64], index: 0, kind: input, shape index: {}]
  %s1 = inlined_call_operand.hbm [shape: f32[2,4,64], index: 1, kind: input, shape index: {}]
  %s2 = inlined_call_operand.vmem [shape: f32[8,4], index: 2, kind: input, shape index: {}]
  %s3 = inlined_call_operand.vmem [shape: f32[8,1], index: 3, kind: input, shape index: {}]
  %s4 = inlined_call_operand.hbm [shape: f32[2,8,64], index: 4, kind: output, shape index: {}]
  %s5 = sld [smem:[#allocation0]]
  $region53: #{tpu_custom_call.1} parent=0
    _
  %s7 = ssub.s32 1, %s5
  %s8 = scalar_select 0, %s7, %s5
  $region1: #{tpu_custom_call.1} parent=0
    #allocation2 [shape = 'u8[4096]{0}', space=vmem, size = 0x1000, scoped, tag = 'input window, operand 1']
    #allocation3 [shape = 's32[2]{0}', space=sflag, size = 0x8, scoped, tag = 'scoped memory for tpu_custom_call.1']
    #allocation4 [shape = 's32[2]{0}', space=sflag, size = 0x8, scoped, tag = 'scoped memory for tpu_custom_call.1']
    #allocation5 [shape = 'u8[8192]{0}', space=vmem, size = 0x2000, scoped, tag = 'output window, operand 0']
    %9 = vsyncpa [#allocation3], 0
    %s10 = scalar_lea.sflag [#allocation3], 1
    %11 = vsyncpa %s10, 0
    %12 = vsyncpa [#allocation4], 0
    %s13 = scalar_lea.sflag [#allocation4], 1
    %14 = vsyncpa %s13, 0
    loop: start=0, step=1, limit=4
    $region2: #{tpu_custom_call.1} parent=1 // loop_pre_header
      _
    $region3: #{tpu_custom_call.1} parent=1 // loop_header
      %s16 = sphi 0, %s20
      %p17 = scmp.ge.s32.totalorder %s16, 4
      %s23 = sphi 0, %s35
      %s24 = sphi 0, %s31
      %s25 = sphi 0, %s23
      %s26 = sphi 0, %s24
      %s27 = sphi 0, %s25
      %s28 = sphi 0, %s26
      %s40 = sphi 0, %s42
      %s43 = sphi 0, %s40
      %s44 = sphi 0, %s43
      %s60 = sphi 0, %s44
      %s68 = sphi 0, %s70
      %s71 = sphi 0, %s68
      %s72 = sphi 0, %s71
      %s88 = sphi 0, %s72
      %s92 = sphi 0, %s92
      %s94 = sphi 0, %s92
      %s95 = sphi 0, %s94
      %s109 = sphi 0, %s95
      %s113 = sphi 0, %s113
      %s115 = sphi 0, %s113
      %s116 = sphi 0, %s115
      %s130 = sphi 0, %s116
      %s138 = sphi 0, %s140
      %s141 = sphi 0, %s138
      %s142 = sphi 0, %s141
      %s158 = sphi 0, %s142
    $region4: #{tpu_custom_call.1} parent=1 // loop_header_branch
      %19 = sbr.rel (%p17) target = $region8
    $region5: #{tpu_custom_call.1} parent=1 // loop_body
      %s21 = ssub.s32 %s16, 1
      %s22 = ssub.s32 %s16, 2
      %s29 = sadd.s32 1, %s24
      %p30 = scmp.ge.s32.totalorder %s29, 1
      %s31 = scalar_select %p30, 0, %s29
      %s32 = sadd.s32 1, %s23
      %s33 = scalar_select %p30, %s32, %s23
      %p34 = scmp.ge.s32.totalorder %s33, 2
      %s35 = scalar_select %p34, 0, %s33
      %s36 = ssub.s32 %s23, %s35
      %s37 = ssub.s32 %s24, %s31
      %s38 = sor.u32 %s36, %s37
      %p39 = scmp.eq.s32.totalorder %s38, 0
      %s41 = sadd.s32 %s40, 1
      %s42 = scalar_select %p39, %s40, %s41
      %p45 = pneg %p39
      %p46 = scmp.eq.s32.totalorder %s16, 1
      %p47 = por %p45, %p46
      %p48 = scmp.ne.s32.totalorder %s40, %s43
      %p49 = scmp.eq.s32.totalorder %s16, 0
      %p50 = por %p48, %p49
      %p51 = scmp.ne.s32.totalorder %s40, %s43
      %p52 = scmp.eq.s32.totalorder %s21, 1
      %p53 = por %p51, %p52
      %p54 = scmp.ne.s32.totalorder %s43, %s44
      %p55 = scmp.eq.s32.totalorder %s21, 0
      %p56 = por %p54, %p55
      %p57 = scmp.ne.s32.totalorder %s43, %s44
      %p58 = scmp.eq.s32.totalorder %s22, 1
      %p59 = por %p57, %p58
      %p61 = scmp.ne.s32.totalorder %s44, %s60
      %p62 = scmp.eq.s32.totalorder %s22, 0
      %p63 = por %p61, %p62
      %s64 = ssub.s32 %s23, %s35
      %s65 = ssub.s32 %s24, %s31
      %s66 = sor.u32 %s64, %s65
      %p67 = scmp.eq.s32.totalorder %s66, 0
      %s69 = sadd.s32 %s68, 1
      %s70 = scalar_select %p67, %s68, %s69
      %p73 = pneg %p67
      %p74 = scmp.eq.s32.totalorder %s16, 1
      %p75 = por %p73, %p74
      %p76 = scmp.ne.s32.totalorder %s68, %s71
      %p77 = scmp.eq.s32.totalorder %s16, 0
      %p78 = por %p76, %p77
      %p79 = scmp.ne.s32.totalorder %s68, %s71
      %p80 = scmp.eq.s32.totalorder %s21, 1
      %p81 = por %p79, %p80
      %p82 = scmp.ne.s32.totalorder %s71, %s72
      %p83 = scmp.eq.s32.totalorder %s21, 0
      %p84 = por %p82, %p83
      %p85 = scmp.ne.s32.totalorder %s71, %s72
      %p86 = scmp.eq.s32.totalorder %s22, 1
      %p87 = por %p85, %p86
      %p89 = scmp.ne.s32.totalorder %s72, %s88
      %p90 = scmp.eq.s32.totalorder %s22, 0
      %p91 = por %p89, %p90
      %s93 = sadd.s32 %s92, 1
      %p96 = scmp.eq.s32.totalorder %s16, 1
      %p97 = scmp.ne.s32.totalorder %s92, %s94
      %p98 = scmp.eq.s32.totalorder %s16, 0
      %p99 = por %p97, %p98
      %p100 = scmp.ne.s32.totalorder %s92, %s94
      %p101 = scmp.eq.s32.totalorder %s21, 1
      %p102 = por %p100, %p101
      %p103 = scmp.ne.s32.totalorder %s94, %s95
      %p104 = scmp.eq.s32.totalorder %s21, 0
      %p105 = por %p103, %p104
      %p106 = scmp.ne.s32.totalorder %s94, %s95
      %p107 = scmp.eq.s32.totalorder %s22, 1
      %p108 = por %p106, %p107
      %p110 = scmp.ne.s32.totalorder %s95, %s109
      %p111 = scmp.eq.s32.totalorder %s22, 0
      %p112 = por %p110, %p111
      %s114 = sadd.s32 %s113, 1
      %p117 = scmp.eq.s32.totalorder %s16, 1
      %p118 = scmp.ne.s32.totalorder %s113, %s115
      %p119 = scmp.eq.s32.totalorder %s16, 0
      %p120 = por %p118, %p119
      %p121 = scmp.ne.s32.totalorder %s113, %s115
      %p122 = scmp.eq.s32.totalorder %s21, 1
      %p123 = por %p121, %p122
      %p124 = scmp.ne.s32.totalorder %s115, %s116
      %p125 = scmp.eq.s32.totalorder %s21, 0
      %p126 = por %p124, %p125
      %p127 = scmp.ne.s32.totalorder %s115, %s116
      %p128 = scmp.eq.s32.totalorder %s22, 1
      %p129 = por %p127, %p128
      %p131 = scmp.ne.s32.totalorder %s116, %s130
      %p132 = scmp.eq.s32.totalorder %s22, 0
      %p133 = por %p131, %p132
      %s134 = ssub.s32 %s23, %s35
      %s135 = ssub.s32 %s24, %s31
      %s136 = sor.u32 %s134, %s135
      %p137 = scmp.eq.s32.totalorder %s136, 0
      %s139 = sadd.s32 %s138, 1
      %s140 = scalar_select %p137, %s138, %s139
      %p143 = pneg %p137
      %p144 = scmp.eq.s32.totalorder %s16, 1
      %p145 = por %p143, %p144
      %p146 = scmp.ne.s32.totalorder %s138, %s141
      %p147 = scmp.eq.s32.totalorder %s16, 0
      %p148 = por %p146, %p147
      %p149 = scmp.ne.s32.totalorder %s138, %s141
      %p150 = scmp.eq.s32.totalorder %s21, 1
      %p151 = por %p149, %p150
      %p152 = scmp.ne.s32.totalorder %s141, %s142
      %p153 = scmp.eq.s32.totalorder %s21, 0
      %p154 = por %p152, %p153
      %p155 = scmp.ne.s32.totalorder %s141, %s142
      %p156 = scmp.eq.s32.totalorder %s22, 1
      %p157 = por %p155, %p156
      %p159 = scmp.ne.s32.totalorder %s142, %s158
      %p160 = scmp.eq.s32.totalorder %s22, 0
      %p161 = por %p159, %p160
      %p162 = scmp.le.s32.totalorder 1, %s16
      %p163 = scmp.lt.s32.totalorder %s16, 3
      %p164 = pnand %p162, %p163
      %p165 = pneg %p164
      // Predicated region
      $region9: #{tpu_custom_call.1} parent=5 // pred_check
        _
      $region10: #{tpu_custom_call.1} parent=5 // pred_check_branch
        %167 = sbr.rel (%p164) target = $region12
      $region11: #{tpu_custom_call.1} parent=5 // pred_region
        %s168 = ssub.s32 %s16, 1
        // Predicated region
        $region13: #{tpu_custom_call.1} parent=11 // pred_check
          %p169 = pneg %p105
        $region14: #{tpu_custom_call.1} parent=11 // pred_check_branch
          %171 = sbr.rel (%p169) target = $region16
        $region15: #{tpu_custom_call.1} parent=11 // pred_region
          _
        $region16: #{tpu_custom_call.1} parent=11 // pred_fallthru
          _
        // Predicated region
        $region17: #{tpu_custom_call.1} parent=11 // pred_check
          %p172 = pneg %p126
        $region18: #{tpu_custom_call.1} parent=11 // pred_check_branch
          %174 = sbr.rel (%p172) target = $region20
        $region19: #{tpu_custom_call.1} parent=11 // pred_region
          _
        $region20: #{tpu_custom_call.1} parent=11 // pred_fallthru
          _
      $region12: #{tpu_custom_call.1} parent=5 // pred_fallthru
        _
      %p175 = scmp.lt.s32.totalorder %s16, 2
      // Predicated region
      $region21: #{tpu_custom_call.1} parent=5 // pred_check
        %p176 = pneg %p175
      $region22: #{tpu_custom_call.1} parent=5 // pred_check_branch
        %178 = sbr.rel (%p176) target = $region24
      $region23: #{tpu_custom_call.1} parent=5 // pred_region
        // Predicated region
        $region25: #{tpu_custom_call.1} parent=23 // pred_check
          %p179 = pneg %p50
        $region26: #{tpu_custom_call.1} parent=23 // pred_check_branch
          %181 = sbr.rel (%p179) target = $region28
        $region27: #{tpu_custom_call.1} parent=23 // pred_region
          %p182 = scmp.lt.s32.totalorder %s23, 1
          %s183 = scalar_select %p182, %s23, 1
          %p184 = scmp.lt.s32.totalorder %s24, 0
          %s185 = scalar_select %p184, %s24, 0
          %s186 = sadd.s32 %s185, %s183
          %s187 = smul.addr %s186, 8
          %s188 = scalar_lea.vmem %s0, %s187
        $region28: #{tpu_custom_call.1} parent=23 // pred_fallthru
          _
        // Predicated region
        $region29: #{tpu_custom_call.1} parent=23 // pred_check
          %p189 = pneg %p78
        $region30: #{tpu_custom_call.1} parent=23 // pred_check_branch
          %191 = sbr.rel (%p189) target = $region32
        $region31: #{tpu_custom_call.1} parent=23 // pred_region
          %s192 = sand.u32 %s68, 1
          %s193 = scalar_lea.sflag [#allocation3], %s192
          %s194 = sand.u32 %s68, 1
          %s195 = smul.addr %s194, 4
          %s196 = scalar_lea.vmem [#allocation2], %s195
          %s198 = ssub.s32 64, 64
          %199 = vsyncadd %s193, %s198
          %s200 = sadd.s32 %s24, %s23
          %s201 = smul.addr %s200, 64
          %s202 = scalar_lea.hbm %s1, %s201
          %s204 = sshll.u32 %s196, 4
          %s205 = int_to_ptr.vmem [resolvable:$true] %s204
          %207 = dma.hbm_to_vmem [thread:$0]  %s202, 64, %s205, %s193
        $region32: #{tpu_custom_call.1} parent=23 // pred_fallthru
          _
      $region24: #{tpu_custom_call.1} parent=5 // pred_fallthru
        _
      %p208 = scmp.le.s32.totalorder 1, %s16
      %p209 = scmp.lt.s32.totalorder %s16, 3
      %p210 = pnand %p208, %p209
      %p211 = pneg %p210
      // Predicated region
      $region33: #{tpu_custom_call.1} parent=5 // pred_check
        _
      $region34: #{tpu_custom_call.1} parent=5 // pred_check_branch
        %213 = sbr.rel (%p210) target = $region36
      $region35: #{tpu_custom_call.1} parent=5 // pred_region
        %s214 = ssub.s32 %s16, 1
        %s215 = sand.u32 %s71, 1
        %s216 = scalar_lea.sflag [#allocation3], %s215
        %s217 = sand.u32 %s71, 1
        %s218 = smul.addr %s217, 4
        %s219 = scalar_lea.vmem [#allocation2], %s218
        // Predicated region
        $region37: #{tpu_custom_call.1} parent=35 // pred_check
          %p220 = pneg %p84
        $region38: #{tpu_custom_call.1} parent=35 // pred_check_branch
          %222 = sbr.rel (%p220) target = $region40
        $region39: #{tpu_custom_call.1} parent=35 // pred_region
          %223 = dma.done %s216, 64
        $region40: #{tpu_custom_call.1} parent=35 // pred_fallthru
          _
        %p224 = scmp.lt.s32.totalorder %s25, 1
        %s225 = scalar_select %p224, %s25, 1
        %p226 = scmp.lt.s32.totalorder %s26, 0
        %s227 = scalar_select %p226, %s26, 0
        %s228 = sadd.s32 %s227, %s225
        %s229 = smul.addr %s228, 8
        %s230 = scalar_lea.vmem %s0, %s229
        %p231 = pneg %p56
        %p232 = pneg %p53
        %s233 = sand.u32 %s71, 1
        %s234 = scalar_lea.sflag [#allocation3], %s233
        %s235 = sand.u32 %s71, 1
        %s236 = smul.addr %s235, 4
        %s237 = scalar_lea.vmem [#allocation2], %s236
        %p238 = pneg %p84
        %p239 = pneg %p81
        %p240 = pneg %p105
        %p241 = pneg %p102
        %p242 = pneg %p126
        %p243 = pneg %p123
        %p244 = pneg %p154
        %p245 = pneg %p151
        %s246 = sand.u32 %s141, 1
        %s247 = scalar_lea.sflag [#allocation4], %s246
        %s248 = sand.u32 %s141, 1
        %s249 = smul.addr %s248, 8
        %s250 = scalar_lea.vmem [#allocation5], %s249
        %p251 = scmp.lt.s32.totalorder %s25, 1
        %s252 = scalar_select %p251, %s25, 1
        %p253 = scmp.lt.s32.totalorder %s26, 0
        %s254 = scalar_select %p253, %s26, 0
        %s255 = sadd.s32 %s254, %s252
        %s256 = smul.addr %s255, 8
        %s257 = scalar_lea.vmem %s0, %s256
        %v258 = vld [vmem:[%s2] sm:$0xff]
        %v259 = vld [vmem:[%s219] sm:$0xf]
        %vm260 = vcmask 31744
        %v262 = vsel %vm260, %v258, 0
        %vm264 = vcmask 1043456
        %v266 = vsel %vm264, %v259, 0
        %268 = vmatprep.subr.mxu0 0.0
        %269 = vmatpush1.msra.mxu0 0.0
        %270 = vmatprep.subr.mxu0 0.0
        %271 = vmatpush1.msra.mxu0 0.0
        %272 = vmatprep.subr.mxu0 0.0
        %273 = vmatpush1.msra.mxu0 0.0
        %274 = vmatprep.subr.mxu0 0.0
        %275 = vmatpush1.msra.mxu0 0.0
        %276 = vmatprep.subr.mxu0 0.0
        %277 = vmatpush1.msra.mxu0 0.0
        %278 = vmatprep.subr.mxu0 0.0
        %279 = vmatpush1.msra.mxu0 0.0
        %280 = vmatprep.subr.mxu0 0.0
        %281 = vmatpush1.msra.mxu0 0.0
        %282 = vmatprep.subr.mxu0 0.0
        %283 = vmatpush1.msra.mxu0 0.0
        %284 = vmatprep.subr.mxu0 0.0
        %285 = vmatpush1.msra.mxu0 0.0
        %286 = vmatprep.subr.mxu0 0.0
        %287 = vmatpush1.msra.mxu0 0.0
        %288 = vmatprep.subr.mxu0 0.0
        %289 = vmatpush1.msra.mxu0 0.0
        %290 = vmatprep.subr.mxu0 0.0
        %291 = vmatpush1.msra.mxu0 0.0
        %292 = vmatprep.subr.mxu0 0.0
        %293 = vmatpush1.msra.mxu0 0.0
        %294 = vmatprep.subr.mxu0 0.0
        %295 = vmatpush1.msra.mxu0 0.0
        %296 = vmatprep.subr.mxu0 0.0
        %297 = vmatpush1.msra.mxu0 0.0
        %298 = vmatprep.subr.mxu0 0.0
        %299 = vmatpush1.msra.mxu0 %v266
        %300 = vmatprep.subr.mxu0 0.0
        %301 = vmatpush2.msra.mxu0 0.0
        %302 = vmatprep.subr.mxu0 0.0
        %303 = vmatpush2.msra.mxu0 0.0
        %304 = vmatprep.subr.mxu0 0.0
        %305 = vmatpush2.msra.mxu0 0.0
        %306 = vmatprep.subr.mxu0 0.0
        %307 = vmatpush2.msra.mxu0 0.0
        %308 = vmatprep.subr.mxu0 0.0
        %309 = vmatpush2.msra.mxu0 0.0
        %310 = vmatprep.subr.mxu0 0.0
        %311 = vmatpush2.msra.mxu0 0.0
        %312 = vmatprep.subr.mxu0 0.0
        %313 = vmatpush2.msra.mxu0 0.0
        %314 = vmatprep.subr.mxu0 0.0
        %315 = vmatpush2.msra.mxu0 0.0
        %316 = vmatprep.subr.mxu0 0.0
        %317 = vmatpush2.msra.mxu0 0.0
        %318 = vmatprep.subr.mxu0 0.0
        %319 = vmatpush2.msra.mxu0 0.0
        %320 = vmatprep.subr.mxu0 0.0
        %321 = vmatpush2.msra.mxu0 0.0
        %322 = vmatprep.subr.mxu0 0.0
        %323 = vmatpush2.msra.mxu0 0.0
        %324 = vmatprep.subr.mxu0 0.0
        %325 = vmatpush2.msra.mxu0 0.0
        %326 = vmatprep.subr.mxu0 0.0
        %327 = vmatpush2.msra.mxu0 0.0
        %328 = vmatprep.subr.mxu0 0.0
        %329 = vmatpush2.msra.mxu0 0.0
        %330 = vmatprep.subr.mxu0 0.0
        %331 = vmatpush2.msra.mxu0 0.0
        %332 = vmatprep.mubr.f32.mxu0 0.0
        %333 = vmatmul.mubr.f32.gmra.mxu0 %v262
        %v334 = vpop.f32.mrf.mxu0
        %v335 = vadd.f32 0.0, %v334
        %v336 = vpop.f32.mrf.mxu0
        %337 = vdwg.mxu0
        %v338 = vld [vmem:[%s257] sm:$0xff]
        %v339 = vadd.f32 %v338, %v335
        %v340 = vld [vmem:[%s3] sm:$0xff]
        %342 = vset.pattern.permute.xlu0 0
        %343 = vperm.xlu0 %342, %v340
        %v344 = vpop.permute.xlu0 %343
        %v346 = vadd.f32 %v339, %v344
        %vm347 = vcmask 523264
        %348 = vst.msk [vmem:[%s250] sm:$0xff] %vm347, %v346
        %s349 = sand.u32 %s141, 1
        %s350 = scalar_lea.sflag [#allocation4], %s349
        %s351 = sand.u32 %s141, 1
        %s352 = smul.addr %s351, 8
        %s353 = scalar_lea.vmem [#allocation5], %s352
        // Predicated region
        $region41: #{tpu_custom_call.1} parent=35 // pred_check
          %p354 = pneg %p151
        $region42: #{tpu_custom_call.1} parent=35 // pred_check_branch
          %356 = sbr.rel (%p354) target = $region44
        $region43: #{tpu_custom_call.1} parent=35 // pred_region
          %s358 = ssub.s32 128, 128
          %359 = vsyncadd %s350, %s358
          %s360 = sadd.s32 %s26, %s25
          %s361 = smul.addr %s360, 128
          %s362 = scalar_lea.hbm %s4, %s361
          %s364 = sshll.u32 %s353, 4
          %s365 = int_to_ptr.vmem [resolvable:$true] %s364
          %367 = dma.vmem_to_hbm [thread:$0]  %s365, 128, %s362, %s350
        $region44: #{tpu_custom_call.1} parent=35 // pred_fallthru
          _
      $region36: #{tpu_custom_call.1} parent=5 // pred_fallthru
        _
      %p368 = scmp.le.s32.totalorder 2, %s16
      // Predicated region
      $region45: #{tpu_custom_call.1} parent=5 // pred_check
        %p369 = pneg %p368
      $region46: #{tpu_custom_call.1} parent=5 // pred_check_branch
        %371 = sbr.rel (%p369) target = $region48
      $region47: #{tpu_custom_call.1} parent=5 // pred_region
        %s372 = ssub.s32 %s16, 2
        // Predicated region
        $region49: #{tpu_custom_call.1} parent=47 // pred_check
          %p373 = pneg %p157
        $region50: #{tpu_custom_call.1} parent=47 // pred_check_branch
          %375 = sbr.rel (%p373) target = $region52
        $region51: #{tpu_custom_call.1} parent=47 // pred_region
          %s376 = sand.u32 %s142, 1
          %s377 = scalar_lea.sflag [#allocation4], %s376
          %s378 = sand.u32 %s142, 1
          %s379 = smul.addr %s378, 8
          %s380 = scalar_lea.vmem [#allocation5], %s379
          %381 = dma.done %s377, 128
        $region52: #{tpu_custom_call.1} parent=47 // pred_fallthru
          _
      $region48: #{tpu_custom_call.1} parent=5 // pred_fallthru
        _
    $region6: #{tpu_custom_call.1} parent=1 // loop_footer
      %s20 = sadd.s32 1, %s16
    $region7: #{tpu_custom_call.1} parent=1 // loop_footer_branch
      %15 = sbr.rel target = $region3
    $region8: #{tpu_custom_call.1} parent=1 // loop_exit
      _
    %382 = vsyncpa [#allocation3], 1
    %s383 = scalar_lea.sflag [#allocation3], 1
    %384 = vsyncpa %s383, 1
    %385 = vsyncpa [#allocation4], 1
    %s386 = scalar_lea.sflag [#allocation4], 1
    %387 = vsyncpa %s386, 1

</llo_original>
